<compile_context>
chip_gen: v6e
topology: v6e:2x2x1
jax: 0.10.0
libtpu: 0.0.40
codegen_flags: <defaults>
</compile_context>

<pallas_src>
import jax
import jax.numpy as jnp
from jax.experimental import pallas as pl
from jax.experimental.pallas import tpu as pltpu

_MIB = 1024 * 1024
_LANE = 128
_SUBLANE = 8


def _ceil_to(x: int, m: int) -> int:
    return -(-x // m) * m


def _vmem_capacity_bytes() -> int:
    """Physical VMEM of the current TPU generation (conservative fallback)."""
    try:
        info = pltpu.get_tpu_info()
        cap = getattr(info, "vmem_capacity_bytes", None)
        if cap:
            return int(cap)
    except Exception:
        pass
    return 64 * _MIB  # v7x-sized conservative default


# ----------------------------- kernels --------------------------------------


def _fused_normalize_kernel(x_ref, o_ref):
    # Block = one whole (sample, channel) slice: (1, nb_bins, nb_frames).
    # Read the ref separately for the reduce and for the multiply so no full-block
    # f32 temporary is kept live (matters for bf16 inputs).
    m = jnp.max(x_ref[...].astype(jnp.float32))          # max over bins*frames
    m = jnp.where(m == 0.0, 1.0, m)                      # max == 0 -> divide by 1
    inv = 1.0 / m                                        # exact reciprocal, hoisted
    o_ref[...] = (x_ref[...].astype(jnp.float32) * inv).astype(o_ref.dtype)


def _make_max_inv_kernel(nb_bins: int, tile_b: int, need_row_mask: bool):
    """Pass 1: per-group running max over row tiles; finalize writes 1/max directly."""

    def kernel(x_ref, inv_ref):
        t = pl.program_id(1)

        @pl.when(t == 0)
        def _():
            inv_ref[...] = jnp.full(inv_ref.shape, -jnp.inf, dtype=inv_ref.dtype)

        x = x_ref[...].astype(jnp.float32)               # (1, tile_b, f)
        if need_row_mask:
            # Ragged last tile: rows beyond nb_bins contain garbage -> mask with -inf
            # (neutral for max). Static no-op branch when the tiling is exact.
            row = t * tile_b + jax.lax.broadcasted_iota(jnp.int32, x.shape, 1)
            x = jnp.where(row < nb_bins, x, -jnp.inf)
        inv_ref[...] = jnp.maximum(inv_ref[...], jnp.max(x))

        @pl.when(t == pl.num_programs(1) - 1)
        def _():
            m = inv_ref[...]
            m = jnp.where(m == 0.0, 1.0, m)              # max_values[max_values == 0] = 1
            inv_ref[...] = 1.0 / m                       # store reciprocal, not max

    return kernel


def _scale_kernel(inv_ref, x_ref, o_ref):
    # inv_ref block: (1, 1, 1) per-group reciprocal; x_ref/o_ref: (1, tile_b, f).
    o_ref[...] = (x_ref[...].astype(jnp.float32) * inv_ref[...]).astype(o_ref.dtype)


# ----------------------------- wrapper ---------------------------------------


def normalize_spec(spectrogram: jax.Array, *, tile_b: int | None = None,
                   force_two_pass: bool = False) -> jax.Array:
    """Pallas equivalent of NormalizeSpec.forward.

    Input/Output: (nb_samples, nb_channels, nb_bins, nb_frames), float dtype.
    """
    n, c, b, f = spectrogram.shape
    dtype = spectrogram.dtype
    itemsize = jnp.dtype(dtype).itemsize
    G = n * c

    # Free reshape (merges leading dims only) — no pad, no extra HBM pass.
    x3 = spectrogram.reshape(G, b, f)

    # --- generation-dependent VMEM budgets -----------------------------------
    cap = _vmem_capacity_bytes()
    if cap >= 100 * _MIB:                 # v5e / v6e: 128 MiB physical VMEM
        fused_limit, fused_vmem = 96 * _MIB, 112 * _MIB
    else:                                  # v7x: 64 MiB physical VMEM
        fused_limit, fused_vmem = 44 * _MIB, 56 * _MIB

    # Estimated VMEM footprint of the fused path: in + out blocks, double-buffered,
    # with layout padding (sublane packing depends on dtype, lanes pad to 128).
    sub = _SUBLANE * max(1, 4 // itemsize)
    pc = _ceil_to(f, _LANE)
    slice_vmem = _ceil_to(b, sub) * pc * itemsize
    fused_footprint = 4 * slice_vmem + 2 * _MIB

    use_fused = (not force_two_pass) and fused_footprint <= fused_limit

    if use_fused:
        # One grid point per (sample, channel) slice: exactly 1 HBM read + 1 HBM write.
        # Block last-two dims equal the full array dims (always legal); a non-128 frame
        # count just means masked tail stores — far cheaper than host-side pad/slice.
        # TODO(synk): on v7x with G == 1 this leaves one TensorCore idle; a per-core row
        # split would recover the second core's HBM bandwidth.
        out3 = pl.pallas_call(
            _fused_normalize_kernel,
            out_shape=jax.ShapeDtypeStruct((G, b, f), dtype),
            grid=(G,),
            in_specs=[pl.BlockSpec((1, b, f), lambda g: (g, 0, 0))],
            out_specs=pl.BlockSpec((1, b, f), lambda g: (g, 0, 0)),
            compiler_params=pltpu.CompilerParams(
                dimension_semantics=("parallel",),
                vmem_limit_bytes=fused_vmem,
            ),
        )(x3)
        return out3.reshape(n, c, b, f)

    # ---- two-pass path: tile over the bins axis (no host-side pad; edge tile masked) --
    if tile_b is None:
        row_vmem = pc * itemsize
        tgt = max(1, (4 * _MIB) // row_vmem)            # ~4 MiB blocks
        tile_b = b if tgt >= b else max(_SUBLANE, (tgt // _SUBLANE) * _SUBLANE)
    else:
        tile_b = min(tile_b, b)
        if tile_b != b and tile_b % _SUBLANE != 0:
            raise ValueError("tile_b must equal nb_bins or be a multiple of 8")

    T = pl.cdiv(b, tile_b)
    need_row_mask = (b % tile_b) != 0
    block_vmem = _ceil_to(tile_b, sub) * pc * itemsize
    two_pass_vmem = min(fused_vmem, max(32 * _MIB, 4 * block_vmem + 16 * _MIB))

    # Pass 1: per-group max with the zero fix-up + reciprocal folded into the finalize.
    inv = pl.pallas_call(
        _make_max_inv_kernel(b, tile_b, need_row_mask),
        out_shape=jax.ShapeDtypeStruct((G, 1, 1), jnp.float32),
        grid=(G, T),
        in_specs=[pl.BlockSpec((1, tile_b, f), lambda g, t: (g, t, 0))],
        out_specs=pl.BlockSpec((1, 1, 1), lambda g, t: (g, 0, 0)),
        compiler_params=pltpu.CompilerParams(
            dimension_semantics=("parallel", "arbitrary"),
            vmem_limit_bytes=two_pass_vmem,
        ),
    )(x3)

    # Pass 2: fully parallel broadcast multiply by the hoisted per-group reciprocal.
    out3 = pl.pallas_call(
        _scale_kernel,
        out_shape=jax.ShapeDtypeStruct((G, b, f), dtype),
        grid=(G, T),
        in_specs=[
            pl.BlockSpec((1, 1, 1), lambda g, t: (g, 0, 0)),
            pl.BlockSpec((1, tile_b, f), lambda g, t: (g, t, 0)),
        ],
        out_specs=pl.BlockSpec((1, tile_b, f), lambda g, t: (g, t, 0)),
        compiler_params=pltpu.CompilerParams(
            dimension_semantics=("parallel", "parallel"),
            vmem_limit_bytes=two_pass_vmem,
        ),
    )(inv, x3)

    return out3.reshape(n, c, b, f)


# ----------------------------- self-test --------------------------------------


def _reference(s: jax.Array) -> jax.Array:
    mv = jnp.max(s, axis=(2, 3), keepdims=True)
    mv = jnp.where(mv == 0, jnp.ones_like(mv), mv)
    return s / mv


if __name__ == "__main__":
    key = jax.random.PRNGKey(0)
    k1, k2, k3 = jax.random.split(key, 3)

    # 1) Fused path, small aligned slice + an all-zero slice (max == 0 -> divide by 1).
    xa = jnp.abs(jax.random.normal(k1, (2, 4, 16, 16), dtype=jnp.float32))
    xa = xa.at[1, 2].set(0.0)
    oa = jax.block_until_ready(normalize_spec(xa))
    assert oa.shape == xa.shape and oa.dtype == xa.dtype
    assert jnp.allclose(oa, _reference(xa), atol=1e-6, rtol=1e-6)

    # 2) Fused path with a non-128-multiple frame count (no host-side pad / slice).
    xb = jnp.abs(jax.random.normal(k2, (2, 4, 16, 100), dtype=jnp.float32))
    xb = xb.at[0, 1].set(0.0)
    ob = jax.block_until_ready(normalize_spec(xb))
    assert ob.shape == xb.shape and ob.dtype == xb.dtype
    assert jnp.allclose(ob, _reference(xb), atol=1e-6, rtol=1e-6)

    # 3) Two-pass path with a ragged last row tile (20 bins, tile_b=8 -> T=3, in-kernel
    #    -inf masking) plus mixed-sign values and an all-zero slice.
    xc = jax.random.normal(k3, (2, 4, 20, 100), dtype=jnp.float32)
    xc = xc.at[1, 0].set(0.0)
    oc = jax.block_until_ready(normalize_spec(xc, force_two_pass=True, tile_b=8))
    assert oc.shape == xc.shape and oc.dtype == xc.dtype
    assert jnp.allclose(oc, _reference(xc), atol=1e-6, rtol=1e-6)

    print("KERNEL_OK")
</pallas_src>

<mosaic_0001>
module attributes {stable_mosaic.version = 11 : i64} {
  func.func @_fused_normalize_kernel(%arg0: i32, %arg1: memref<1x16x16xf32, #tpu.memory_space<vmem>>, %arg2: memref<1x16x16xf32, #tpu.memory_space<vmem>>) attributes {dimension_semantics = [#tpu.dimension_semantics<parallel>], iteration_bounds = array<i64: 8>, scalar_prefetch = 0 : i64, scratch_operands = 0 : i64, tpu.core_type = #tpu.core_type<tc>, window_params = [{transform_indices = @transform_0, window_bounds = array<i64: 1, 16, 16>}, {transform_indices = @transform_1, window_bounds = array<i64: 1, 16, 16>}]} {
    %c0 = arith.constant 0 : index
    %c0_0 = arith.constant 0 : index
    %c0_1 = arith.constant 0 : index
    %0 = vector.load %arg1[%c0, %c0_0, %c0_1] : memref<1x16x16xf32, #tpu.memory_space<vmem>>, vector<1x16x16xf32>
    %1 = vector.shape_cast %0 : vector<1x16x16xf32> to vector<1x1x16x16xf32>
    %cst = arith.constant dense<0xFF800000> : vector<1xf32>
    %2 = vector.multi_reduction <maximumf>, %1, %cst [1, 2, 3] : vector<1x1x16x16xf32> to vector<1xf32>
    %3 = vector.shape_cast %2 : vector<1xf32> to vector<1x1x1x1xf32>
    %4 = vector.extract %3[0, 0, 0, 0] : f32 from vector<1x1x1x1xf32>
    %cst_2 = arith.constant 0.000000e+00 : f32
    %5 = arith.cmpf oeq, %4, %cst_2 : f32
    %cst_3 = arith.constant 1.000000e+00 : f32
    %6 = arith.select %5, %cst_3, %4 : f32
    %cst_4 = arith.constant 1.000000e+00 : f32
    %7 = arith.divf %cst_4, %6 : f32
    %c0_5 = arith.constant 0 : index
    %c0_6 = arith.constant 0 : index
    %c0_7 = arith.constant 0 : index
    %8 = vector.load %arg1[%c0_5, %c0_6, %c0_7] : memref<1x16x16xf32, #tpu.memory_space<vmem>>, vector<1x16x16xf32>
    %9 = vector.broadcast %7 : f32 to vector<1x16x16xf32>
    %10 = arith.mulf %8, %9 : vector<1x16x16xf32>
    %c0_8 = arith.constant 0 : index
    %c0_9 = arith.constant 0 : index
    %c0_10 = arith.constant 0 : index
    %11 = vector.load %arg2[%c0_8, %c0_9, %c0_10] : memref<1x16x16xf32, #tpu.memory_space<vmem>>, vector<1x16x16xf32>
    tpu.vector_store %arg2[%c0_8, %c0_9, %c0_10], %10 {strides = array<i32>} : memref<1x16x16xf32, #tpu.memory_space<vmem>>, vector<1x16x16xf32>,
    return
  }
  func.func @transform_0(%arg0: i32) -> (i32, i32, i32) {
    %c0_i32 = arith.constant 0 : i32
    %c0_i32_0 = arith.constant 0 : i32
    %c0_i32_1 = arith.constant 0 : i32
    return %arg0, %c0_i32, %c0_i32_0 : i32, i32, i32
  }
  func.func @transform_1(%arg0: i32) -> (i32, i32, i32) {
    %c0_i32 = arith.constant 0 : i32
    %c0_i32_0 = arith.constant 0 : i32
    %c0_i32_1 = arith.constant 0 : i32
    return %arg0, %c0_i32, %c0_i32_0 : i32, i32, i32
  }
}

</mosaic_0001>

<llo_original>
// kernel: tpu_custom_call.1
$region0: #{tpu_custom_call.1}
  #allocation0 [shape = 'u32[]', space=smem, size = 0x4, offset = 0x4, fixed_abs, tag = 'smem constant byte address 0x4 - core index']
  #allocation1 [shape = 'u32[144,128]{1,0:T(1,128)}', space=vmem, size = 0x12000, scoped, tag = 'internal scratch']
  %s0 = inlined_call_operand.hbm [shape: f32[8,16,16], index: 0, kind: input, shape index: {}]
  %s1 = inlined_call_operand.hbm [shape: f32[8,16,16], index: 1, kind: output, shape index: {}]
  %s2 = sld [smem:[#allocation0]]
  $region41: #{tpu_custom_call.1} parent=0
    _
  %s4 = ssub.s32 1, %s2
  %s5 = scalar_select 0, %s4, %s2
  $region1: #{tpu_custom_call.1} parent=0
    #allocation2 [shape = 'u8[16384]{0}', space=vmem, size = 0x4000, scoped, tag = 'input window, operand 0']
    #allocation3 [shape = 's32[2]{0}', space=sflag, size = 0x8, scoped, tag = 'scoped memory for tpu_custom_call.1']
    #allocation4 [shape = 's32[2]{0}', space=sflag, size = 0x8, scoped, tag = 'scoped memory for tpu_custom_call.1']
    #allocation5 [shape = 'u8[16384]{0}', space=vmem, size = 0x4000, scoped, tag = 'output window, operand 0']
    %6 = vsyncpa [#allocation3], 0
    %s7 = scalar_lea.sflag [#allocation3], 1
    %8 = vsyncpa %s7, 0
    %9 = vsyncpa [#allocation4], 0
    %s10 = scalar_lea.sflag [#allocation4], 1
    %11 = vsyncpa %s10, 0
    loop: start=0, step=1, limit=10
    $region2: #{tpu_custom_call.1} parent=1 // loop_pre_header
      _
    $region3: #{tpu_custom_call.1} parent=1 // loop_header
      %s13 = sphi 0, %s17
      %p14 = scmp.ge.s32.totalorder %s13, 10
      %s23 = sphi 0, %s25
      %s26 = sphi 0, %s23
      %s27 = sphi 0, %s26
      %s43 = sphi 0, %s27
      %s49 = sphi 0, %s51
      %s52 = sphi 0, %s49
      %s53 = sphi 0, %s52
      %s69 = sphi 0, %s53
    $region4: #{tpu_custom_call.1} parent=1 // loop_header_branch
      %16 = sbr.rel (%p14) target = $region8
    $region5: #{tpu_custom_call.1} parent=1 // loop_body
      %s18 = ssub.s32 %s13, 1
      %s19 = ssub.s32 %s13, 2
      %s20 = sadd.s32 %s13, 1
      %s21 = ssub.s32 %s13, %s20
      %p22 = scmp.eq.s32.totalorder %s21, 0
      %s24 = sadd.s32 %s23, 1
      %s25 = scalar_select %p22, %s23, %s24
      %p28 = pneg %p22
      %p29 = scmp.eq.s32.totalorder %s13, 7
      %p30 = por %p28, %p29
      %p31 = scmp.ne.s32.totalorder %s23, %s26
      %p32 = scmp.eq.s32.totalorder %s13, 0
      %p33 = por %p31, %p32
      %p34 = scmp.ne.s32.totalorder %s23, %s26
      %p35 = scmp.eq.s32.totalorder %s18, 7
      %p36 = por %p34, %p35
      %p37 = scmp.ne.s32.totalorder %s26, %s27
      %p38 = scmp.eq.s32.totalorder %s18, 0
      %p39 = por %p37, %p38
      %p40 = scmp.ne.s32.totalorder %s26, %s27
      %p41 = scmp.eq.s32.totalorder %s19, 7
      %p42 = por %p40, %p41
      %p44 = scmp.ne.s32.totalorder %s27, %s43
      %p45 = scmp.eq.s32.totalorder %s19, 0
      %p46 = por %p44, %p45
      %s47 = ssub.s32 %s13, %s20
      %p48 = scmp.eq.s32.totalorder %s47, 0
      %s50 = sadd.s32 %s49, 1
      %s51 = scalar_select %p48, %s49, %s50
      %p54 = pneg %p48
      %p55 = scmp.eq.s32.totalorder %s13, 7
      %p56 = por %p54, %p55
      %p57 = scmp.ne.s32.totalorder %s49, %s52
      %p58 = scmp.eq.s32.totalorder %s13, 0
      %p59 = por %p57, %p58
      %p60 = scmp.ne.s32.totalorder %s49, %s52
      %p61 = scmp.eq.s32.totalorder %s18, 7
      %p62 = por %p60, %p61
      %p63 = scmp.ne.s32.totalorder %s52, %s53
      %p64 = scmp.eq.s32.totalorder %s18, 0
      %p65 = por %p63, %p64
      %p66 = scmp.ne.s32.totalorder %s52, %s53
      %p67 = scmp.eq.s32.totalorder %s19, 7
      %p68 = por %p66, %p67
      %p70 = scmp.ne.s32.totalorder %s53, %s69
      %p71 = scmp.eq.s32.totalorder %s19, 0
      %p72 = por %p70, %p71
      %p73 = scmp.le.s32.totalorder 1, %s13
      %p74 = scmp.lt.s32.totalorder %s13, 9
      %p75 = pnand %p73, %p74
      %p76 = pneg %p75
      // Predicated region
      $region9: #{tpu_custom_call.1} parent=5 // pred_check
        _
      $region10: #{tpu_custom_call.1} parent=5 // pred_check_branch
        %78 = sbr.rel (%p75) target = $region12
      $region11: #{tpu_custom_call.1} parent=5 // pred_region
        %s79 = ssub.s32 %s13, 1
      $region12: #{tpu_custom_call.1} parent=5 // pred_fallthru
        _
      %p80 = scmp.lt.s32.totalorder %s13, 8
      // Predicated region
      $region13: #{tpu_custom_call.1} parent=5 // pred_check
        %p81 = pneg %p80
      $region14: #{tpu_custom_call.1} parent=5 // pred_check_branch
        %83 = sbr.rel (%p81) target = $region16
      $region15: #{tpu_custom_call.1} parent=5 // pred_region
        // Predicated region
        $region17: #{tpu_custom_call.1} parent=15 // pred_check
          %p84 = pneg %p33
        $region18: #{tpu_custom_call.1} parent=15 // pred_check_branch
          %86 = sbr.rel (%p84) target = $region20
        $region19: #{tpu_custom_call.1} parent=15 // pred_region
          %s87 = sand.u32 %s23, 1
          %s88 = scalar_lea.sflag [#allocation3], %s87
          %s89 = sand.u32 %s23, 1
          %s90 = smul.addr %s89, 16
          %s91 = scalar_lea.vmem [#allocation2], %s90
          %s93 = ssub.s32 256, 256
          %94 = vsyncadd %s88, %s93
          %s95 = smul.addr %s13, 2
          %s96 = smul.addr %s95, 128
          %s97 = scalar_lea.hbm %s0, %s96
          %s98 = sshll.u32 %s91, 4
          %s99 = int_to_ptr.vmem [resolvable:$true] %s98
          %104 = dma.hbm_to_vmem [thread:$0]  %s97, 256, %s99, %s88, 128, 128, 8
        $region20: #{tpu_custom_call.1} parent=15 // pred_fallthru
          _
      $region16: #{tpu_custom_call.1} parent=5 // pred_fallthru
        _
      %p105 = scmp.le.s32.totalorder 1, %s13
      %p106 = scmp.lt.s32.totalorder %s13, 9
      %p107 = pnand %p105, %p106
      %p108 = pneg %p107
      // Predicated region
      $region21: #{tpu_custom_call.1} parent=5 // pred_check
        _
      $region22: #{tpu_custom_call.1} parent=5 // pred_check_branch
        %110 = sbr.rel (%p107) target = $region24
      $region23: #{tpu_custom_call.1} parent=5 // pred_region
        %s111 = ssub.s32 %s13, 1
        %s112 = sand.u32 %s26, 1
        %s113 = scalar_lea.sflag [#allocation3], %s112
        %s114 = sand.u32 %s26, 1
        %s115 = smul.addr %s114, 16
        %s116 = scalar_lea.vmem [#allocation2], %s115
        // Predicated region
        $region25: #{tpu_custom_call.1} parent=23 // pred_check
          %p117 = pneg %p39
        $region26: #{tpu_custom_call.1} parent=23 // pred_check_branch
          %119 = sbr.rel (%p117) target = $region28
        $region27: #{tpu_custom_call.1} parent=23 // pred_region
          %120 = dma.done %s113, 256
        $region28: #{tpu_custom_call.1} parent=23 // pred_fallthru
          _
        %s121 = sand.u32 %s26, 1
        %s122 = scalar_lea.sflag [#allocation3], %s121
        %s123 = sand.u32 %s26, 1
        %s124 = smul.addr %s123, 16
        %s125 = scalar_lea.vmem [#allocation2], %s124
        %p126 = pneg %p39
        %p127 = pneg %p36
        %p128 = pneg %p65
        %p129 = pneg %p62
        %s130 = sand.u32 %s52, 1
        %s131 = scalar_lea.sflag [#allocation4], %s130
        %s132 = sand.u32 %s52, 1
        %s133 = smul.addr %s132, 16
        %s134 = scalar_lea.vmem [#allocation5], %s133
        %v135 = vld [vmem:[%s116] sm:$0xff]
        %v136 = vld [vmem:[%s116 + $0x8] sm:$0xff]
        %vm137 = vcmask 130048
        %v138 = vsel %vm137, %v135, -inf
        %v139 = vsel %vm137, %v136, -inf
        %v140 = vmax.f32 %v138, %v139
        %141 = vmax.xlane.f32.xlu0 %v140
        %v142 = vpop.xlane.xlu0 %141
        %v143 = vrot.slane %v142, 4
        %v144 = vmax.f32 %v142, %v143
        %v145 = vrot.slane %v144, 2
        %v146 = vmax.f32 %v144, %v145
        %v147 = vrot.slane %v146, 1
        %v148 = vmax.f32 %v146, %v147
        %s149 = vtos %v148
        %p150 = scmp.eq.f32.partialorder %s149, 0.0
        %s151 = scalar_select %p150, 1.0, %s149
        %v152 = vstv %s151
        %v153 = vrcp.pop %v152
        %s154 = vtos %v153
        %v155 = vstv %s154
        %v156 = vmul.f32 %v135, %v155
        %v157 = vmul.f32 %v136, %v155
        %158 = vst.msk [vmem:[%s134] sm:$0xff] %vm137, %v156
        %159 = vst.msk [vmem:[%s134 + $0x8] sm:$0xff] %vm137, %v157
        %s160 = sand.u32 %s52, 1
        %s161 = scalar_lea.sflag [#allocation4], %s160
        %s162 = sand.u32 %s52, 1
        %s163 = smul.addr %s162, 16
        %s164 = scalar_lea.vmem [#allocation5], %s163
        // Predicated region
        $region29: #{tpu_custom_call.1} parent=23 // pred_check
          %p165 = pneg %p62
        $region30: #{tpu_custom_call.1} parent=23 // pred_check_branch
          %167 = sbr.rel (%p165) target = $region32
        $region31: #{tpu_custom_call.1} parent=23 // pred_region
          %s169 = ssub.s32 256, 256
          %170 = vsyncadd %s161, %s169
          %s171 = smul.addr %s18, 2
          %s172 = smul.addr %s171, 128
          %s173 = scalar_lea.hbm %s1, %s172
          %s174 = sshll.u32 %s164, 4
          %s175 = int_to_ptr.vmem [resolvable:$true] %s174
          %180 = dma.vmem_to_hbm [thread:$0]  %s175, 256, %s173, %s161, 128, 128, 8
        $region32: #{tpu_custom_call.1} parent=23 // pred_fallthru
          _
      $region24: #{tpu_custom_call.1} parent=5 // pred_fallthru
        _
      %p181 = scmp.le.s32.totalorder 2, %s13
      // Predicated region
      $region33: #{tpu_custom_call.1} parent=5 // pred_check
        %p182 = pneg %p181
      $region34: #{tpu_custom_call.1} parent=5 // pred_check_branch
        %184 = sbr.rel (%p182) target = $region36
      $region35: #{tpu_custom_call.1} parent=5 // pred_region
        %s185 = ssub.s32 %s13, 2
        // Predicated region
        $region37: #{tpu_custom_call.1} parent=35 // pred_check
          %p186 = pneg %p68
        $region38: #{tpu_custom_call.1} parent=35 // pred_check_branch
          %188 = sbr.rel (%p186) target = $region40
        $region39: #{tpu_custom_call.1} parent=35 // pred_region
          %s189 = sand.u32 %s53, 1
          %s190 = scalar_lea.sflag [#allocation4], %s189
          %s191 = sand.u32 %s53, 1
          %s192 = smul.addr %s191, 16
          %s193 = scalar_lea.vmem [#allocation5], %s192
          %194 = dma.done %s190, 256
        $region40: #{tpu_custom_call.1} parent=35 // pred_fallthru
          _
      $region36: #{tpu_custom_call.1} parent=5 // pred_fallthru
        _
    $region6: #{tpu_custom_call.1} parent=1 // loop_footer
      %s17 = sadd.s32 1, %s13
    $region7: #{tpu_custom_call.1} parent=1 // loop_footer_branch
      %12 = sbr.rel target = $region3
    $region8: #{tpu_custom_call.1} parent=1 // loop_exit
      _
    %195 = vsyncpa [#allocation3], 1
    %s196 = scalar_lea.sflag [#allocation3], 1
    %197 = vsyncpa %s196, 1
    %198 = vsyncpa [#allocation4], 1
    %s199 = scalar_lea.sflag [#allocation4], 1
    %200 = vsyncpa %s199, 1

</llo_original>
